<compile_context>
chip_gen: v7x
topology: tpu7x:2x2x1
jax: 0.10.0
libtpu: 0.0.40
codegen_flags: <defaults>
</compile_context>

<pallas_src>
import functools

import jax
import jax.numpy as jnp
from jax.experimental import pallas as pl
from jax.experimental.pallas import tpu as pltpu

LANE = 128
SUBLANE = 8


def _round_up(x, m):
    return ((x + m - 1) // m) * m


def _fused_encoder_kernel(*refs, num_layers, use_bf16):
    # refs = (x_ref, w0_ref, b0_ref, w1_ref, b1_ref, ..., o_ref)
    # x_ref: [TILE_B, d_in]          (natural, unpadded feature width)
    # wL_ref: [prev_out_pad, out_pad]  bL_ref: [1, out_pad]
    # o_ref: [TILE_B, out_pad_last]
    x_ref = refs[0]
    o_ref = refs[-1]
    acc = x_ref[...].astype(jnp.float32)
    for l in range(num_layers):          # static, small layer count -> unrolled
        w_ref = refs[1 + 2 * l]
        b_ref = refs[2 + 2 * l]
        lhs = acc.astype(jnp.bfloat16) if use_bf16 else acc
        acc = jnp.dot(lhs, w_ref[...], preferred_element_type=jnp.float32)
        acc = acc + b_ref[...]           # (1, out_pad) broadcast over batch tile
        acc = jnp.maximum(acc, 0.0)      # hidden_activation == ReLU (f32, v5e-safe)
        # TODO(synk): training-mode dropout (scaled Bernoulli mask via
        # pltpu.prng_*) not applied; nn.Dropout is identity in eval mode,
        # which is what we reproduce here.
    o_ref[...] = acc.astype(o_ref.dtype)


def prepare_params(params, *, use_bf16=False):
    """One-time parameter prep, hoisted out of the per-call hot path.

    `params`: list of (w, b) with w shaped (d_in, d_out), computing x @ w.
    Each layer is padded to its own lane-rounded shape; padded rows/cols are
    zero, so the padded lanes stay exactly zero through bias+ReLU and the
    f32 math is bit-identical to the unpadded reference.
    """
    w_dtype = jnp.bfloat16 if use_bf16 else jnp.float32
    d_in0 = params[0][0].shape[0]
    prev_pad = d_in0                       # layer-0 K stays at natural width
    w_list, b_list = [], []
    for (w, b) in params:
        din, dout = w.shape
        dout_pad = _round_up(dout, LANE)
        w_pad = jnp.zeros((prev_pad, dout_pad), jnp.float32)
        w_pad = w_pad.at[:din, :dout].set(w.astype(jnp.float32))
        b_pad = jnp.zeros((1, dout_pad), jnp.float32)
        b_pad = b_pad.at[0, :dout].set(b.astype(jnp.float32))
        w_list.append(w_pad.astype(w_dtype))   # bf16 stored at prep time if requested
        b_list.append(b_pad)                   # bias stays f32 (f32 VPU add + ReLU)
        prev_pad = dout_pad
    return {
        "weights": w_list,
        "biases": b_list,
        "d_in": d_in0,
        "d_out": params[-1][0].shape[1],
        "use_bf16": use_bf16,
    }


def encoder_forward(x, prepped, *, tile_b=256):
    """Fused Pallas forward of the Encoder (one pallas_call for all layers)."""
    batch, d_in = x.shape
    assert d_in == prepped["d_in"], (d_in, prepped["d_in"])
    w_list, b_list = prepped["weights"], prepped["biases"]
    num_layers = len(w_list)
    d_out_pad = w_list[-1].shape[1]
    d_out = prepped["d_out"]

    # Batch tiling: large tiles amortize per-grid-step overhead and fill the
    # MXU rows (v6e), but keep >= 2 grid steps so v7x's 2 TensorCores both get
    # work under dimension_semantics=("parallel",).
    b_al = _round_up(batch, SUBLANE)
    tile_b = min(tile_b, b_al)
    if b_al // tile_b < 2 and b_al >= 2 * SUBLANE:
        tile_b = _round_up(pl.cdiv(b_al, 2), SUBLANE)
    b_padded = _round_up(batch, tile_b)
    if b_padded != batch:
        x_in = jnp.zeros((b_padded, d_in), x.dtype).at[:batch].set(x)
    else:
        x_in = x

    kernel = functools.partial(
        _fused_encoder_kernel,
        num_layers=num_layers,
        use_bf16=prepped["use_bf16"],
    )

    # Weights / biases: constant index_map -> loaded once, VMEM-resident across
    # all batch grid steps; only activation tiles are pipelined.
    param_specs = []
    param_args = []
    for l in range(num_layers):
        param_specs.append(pl.BlockSpec(w_list[l].shape, lambda i: (0, 0)))
        param_specs.append(pl.BlockSpec(b_list[l].shape, lambda i: (0, 0)))
        param_args += [w_list[l], b_list[l]]

    flops = 2 * b_padded * sum(w.shape[0] * w.shape[1] for w in w_list)
    bytes_accessed = (
        x_in.size * x_in.dtype.itemsize
        + sum(w.size * w.dtype.itemsize for w in w_list)
        + sum(b.size * b.dtype.itemsize for b in b_list)
        + b_padded * d_out_pad * x.dtype.itemsize
    )

    out_pad = pl.pallas_call(
        kernel,
        out_shape=jax.ShapeDtypeStruct((b_padded, d_out_pad), x.dtype),
        grid_spec=pltpu.PrefetchScalarGridSpec(
            num_scalar_prefetch=0,
            grid=(b_padded // tile_b,),
            in_specs=[
                # Activation tiles: pipelined over the batch grid; feature dim
                # kept at its natural width (full-extent block is legal).
                pl.BlockSpec((tile_b, d_in), lambda i: (i, 0)),
            ] + param_specs,
            out_specs=pl.BlockSpec((tile_b, d_out_pad), lambda i: (i, 0)),
        ),
        compiler_params=pltpu.CompilerParams(
            dimension_semantics=("parallel",),   # shards across TCs on v7x
        ),
        cost_estimate=pl.CostEstimate(
            flops=flops, transcendentals=0, bytes_accessed=bytes_accessed),
    )(x_in, *param_args)

    return out_pad[:batch, :d_out]


def init_encoder_params(key, input_size, hidden_neurons, dtype=jnp.float32):
    """Deterministic parameter init mirroring Encoder.__init__ layer shapes.

    Layers: input_size -> hidden_neurons[0], then
            hidden_neurons[i-1] -> hidden_neurons[i]
            for i in range(1, (len(hidden_neurons)+1)//2)
    Weights are stored as (d_in, d_out) for x @ W (transpose of PyTorch layout).
    """
    sizes = [input_size, hidden_neurons[0]]
    for i in range(1, int((len(hidden_neurons) + 1) / 2)):
        sizes.append(hidden_neurons[i])
    params = []
    for li in range(len(sizes) - 1):
        d_in, d_out = sizes[li], sizes[li + 1]
        key, kw, kb = jax.random.split(key, 3)
        bound = 1.0 / jnp.sqrt(jnp.float32(d_in))  # PyTorch default Linear init
        w = jax.random.uniform(kw, (d_in, d_out), dtype, -bound, bound)
        b = jax.random.uniform(kb, (d_out,), dtype, -bound, bound)
        params.append((w, b))
    return params


if __name__ == "__main__":
    key = jax.random.PRNGKey(0)

    # Windowed time-series vectors; batch large enough to exercise a 2-step
    # batch grid (both v7x TensorCores get work) but still small/fast.
    batch = 256
    input_size = 16
    hidden_neurons = [32, 16, 8]   # encoder layers: 16 -> 32, 32 -> 16

    k_params, k_x = jax.random.split(key)
    params = init_encoder_params(k_params, input_size, hidden_neurons)
    x = jax.random.normal(k_x, (batch, input_size), jnp.float32)

    prepped = prepare_params(params, use_bf16=False)   # one-time prep, off hot path
    out = encoder_forward(x, prepped, tile_b=256)
    out = jax.block_until_ready(out)

    # Pure-JAX reference check (Linear + ReLU chain, eval-mode dropout).
    ref = x
    for (wmat, bvec) in params:
        ref = jnp.maximum(ref @ wmat + bvec, 0.0)

    assert out.shape == (batch, hidden_neurons[1]), out.shape
    assert jnp.allclose(out, ref, atol=1e-5, rtol=1e-5)

    print("KERNEL_OK")
</pallas_src>

<mosaic_0001>
module attributes {stable_mosaic.version = 11 : i64} {
  func.func @_fused_encoder_kernel(%arg0: i32, %arg1: memref<128x16xf32, #tpu.memory_space<vmem>>, %arg2: memref<16x128xf32, #tpu.memory_space<vmem>>, %arg3: memref<1x128xf32, #tpu.memory_space<vmem>>, %arg4: memref<128x128xf32, #tpu.memory_space<vmem>>, %arg5: memref<1x128xf32, #tpu.memory_space<vmem>>, %arg6: memref<128x128xf32, #tpu.memory_space<vmem>>) attributes {dimension_semantics = [#tpu.dimension_semantics<parallel>], iteration_bounds = array<i64: 2>, scalar_prefetch = 0 : i64, scratch_operands = 0 : i64, tpu.core_type = #tpu.core_type<tc>, window_params = [{transform_indices = @transform_0, window_bounds = array<i64: 128, 16>}, {pipeline_mode = #tpu.pipeline_mode<synchronous>, transform_indices = @transform_1, window_bounds = array<i64: 16, 128>}, {pipeline_mode = #tpu.pipeline_mode<synchronous>, transform_indices = @transform_2, window_bounds = array<i64: 1, 128>}, {pipeline_mode = #tpu.pipeline_mode<synchronous>, transform_indices = @transform_3, window_bounds = array<i64: 128, 128>}, {pipeline_mode = #tpu.pipeline_mode<synchronous>, transform_indices = @transform_4, window_bounds = array<i64: 1, 128>}, {transform_indices = @transform_5, window_bounds = array<i64: 128, 128>}]} {
    %c0 = arith.constant 0 : index
    %c0_0 = arith.constant 0 : index
    %0 = vector.load %arg1[%c0, %c0_0] : memref<128x16xf32, #tpu.memory_space<vmem>>, vector<128x16xf32>
    %c0_1 = arith.constant 0 : index
    %c0_2 = arith.constant 0 : index
    %1 = vector.load %arg2[%c0_1, %c0_2] : memref<16x128xf32, #tpu.memory_space<vmem>>, vector<16x128xf32>
    %cst = arith.constant dense<0.000000e+00> : vector<128x128xf32>
    %2 = tpu.matmul %0, %1, %cst {dimension_numbers = #tpu.dot_dimension_numbers<[1], [0], [0], [1], [0, 0, 1, 1], [], []>} : vector<128x16xf32>, vector<16x128xf32>, vector<128x128xf32> -> vector<128x128xf32>
    %c0_3 = arith.constant 0 : index
    %c0_4 = arith.constant 0 : index
    %3 = vector.load %arg3[%c0_3, %c0_4] : memref<1x128xf32, #tpu.memory_space<vmem>>, vector<1x128xf32>
    %4 = vector.broadcast %3 : vector<1x128xf32> to vector<128x128xf32>
    %5 = arith.addf %2, %4 : vector<128x128xf32>
    %cst_5 = arith.constant 0.000000e+00 : f32
    %6 = vector.broadcast %cst_5 : f32 to vector<128x128xf32>
    %7 = arith.maximumf %5, %6 : vector<128x128xf32>
    %c0_6 = arith.constant 0 : index
    %c0_7 = arith.constant 0 : index
    %8 = vector.load %arg4[%c0_6, %c0_7] : memref<128x128xf32, #tpu.memory_space<vmem>>, vector<128x128xf32>
    %cst_8 = arith.constant dense<0.000000e+00> : vector<128x128xf32>
    %9 = tpu.matmul %7, %8, %cst_8 {dimension_numbers = #tpu.dot_dimension_numbers<[1], [0], [0], [1], [0, 0, 1, 1], [], []>} : vector<128x128xf32>, vector<128x128xf32>, vector<128x128xf32> -> vector<128x128xf32>
    %c0_9 = arith.constant 0 : index
    %c0_10 = arith.constant 0 : index
    %10 = vector.load %arg5[%c0_9, %c0_10] : memref<1x128xf32, #tpu.memory_space<vmem>>, vector<1x128xf32>
    %11 = vector.broadcast %10 : vector<1x128xf32> to vector<128x128xf32>
    %12 = arith.addf %9, %11 : vector<128x128xf32>
    %cst_11 = arith.constant 0.000000e+00 : f32
    %13 = vector.broadcast %cst_11 : f32 to vector<128x128xf32>
    %14 = arith.maximumf %12, %13 : vector<128x128xf32>
    %c0_12 = arith.constant 0 : index
    %c0_13 = arith.constant 0 : index
    %15 = vector.load %arg6[%c0_12, %c0_13] : memref<128x128xf32, #tpu.memory_space<vmem>>, vector<128x128xf32>
    tpu.vector_store %arg6[%c0_12, %c0_13], %14 {strides = array<i32>} : memref<128x128xf32, #tpu.memory_space<vmem>>, vector<128x128xf32>,
    return
  }
  func.func @transform_0(%arg0: i32) -> (i32, i32) {
    %c0_i32 = arith.constant 0 : i32
    %c0_i32_0 = arith.constant 0 : i32
    return %arg0, %c0_i32 : i32, i32
  }
  func.func @transform_1(%arg0: i32) -> (i32, i32) {
    %c0_i32 = arith.constant 0 : i32
    %c0_i32_0 = arith.constant 0 : i32
    %c0_i32_1 = arith.constant 0 : i32
    return %c0_i32, %c0_i32_0 : i32, i32
  }
  func.func @transform_2(%arg0: i32) -> (i32, i32) {
    %c0_i32 = arith.constant 0 : i32
    %c0_i32_0 = arith.constant 0 : i32
    %c0_i32_1 = arith.constant 0 : i32
    return %c0_i32, %c0_i32_0 : i32, i32
  }
  func.func @transform_3(%arg0: i32) -> (i32, i32) {
    %c0_i32 = arith.constant 0 : i32
    %c0_i32_0 = arith.constant 0 : i32
    %c0_i32_1 = arith.constant 0 : i32
    return %c0_i32, %c0_i32_0 : i32, i32
  }
  func.func @transform_4(%arg0: i32) -> (i32, i32) {
    %c0_i32 = arith.constant 0 : i32
    %c0_i32_0 = arith.constant 0 : i32
    %c0_i32_1 = arith.constant 0 : i32
    return %c0_i32, %c0_i32_0 : i32, i32
  }
  func.func @transform_5(%arg0: i32) -> (i32, i32) {
    %c0_i32 = arith.constant 0 : i32
    %c0_i32_0 = arith.constant 0 : i32
    return %arg0, %c0_i32 : i32, i32
  }
}

</mosaic_0001>

<llo_original>
// kernel: tpu_custom_call.1
$region0: #{tpu_custom_call.1}
  #allocation0 [shape = 'u32[]', space=smem, size = 0x4, offset = 0x4, fixed_abs, tag = 'smem constant byte address 0x4 - core index']
  #allocation1 [shape = 'u32[144,128]{1,0:T(1,128)}', space=vmem, size = 0x12000, scoped, tag = 'internal scratch']
  %s0 = inlined_call_operand.vmem [shape: f32[256,16], index: 0, kind: input, shape index: {}]
  %s1 = inlined_call_operand.vmem [shape: f32[16,128], index: 1, kind: input, shape index: {}]
  %s2 = inlined_call_operand.vmem [shape: f32[1,128], index: 2, kind: input, shape index: {}]
  %s3 = inlined_call_operand.vmem [shape: f32[128,128], index: 3, kind: input, shape index: {}]
  %s4 = inlined_call_operand.vmem [shape: f32[1,128], index: 4, kind: input, shape index: {}]
  %s5 = inlined_call_operand.hbm [shape: f32[256,128], index: 5, kind: output, shape index: {}]
  %s6 = sld [smem:[#allocation0]]
  $region53: #{tpu_custom_call.1} parent=0
    _
  %s8 = ssub.s32 1, %s6
  %s9 = scalar_select 0, %s8, %s6
  $region1: #{tpu_custom_call.1} parent=0
    #allocation2 [shape = 'u8[131072]{0}', space=vmem, size = 0x20000, scoped, tag = 'output window, operand 0']
    #allocation3 [shape = 's32[2]{0}', space=sflag, size = 0x8, scoped, tag = 'scoped memory for tpu_custom_call.1']
    %10 = vsyncpa [#allocation3], 0
    %s11 = scalar_lea.sflag [#allocation3], 1
    %12 = vsyncpa %s11, 0
    loop: start=0, step=1, limit=4
    $region2: #{tpu_custom_call.1} parent=1 // loop_pre_header
      _
    $region3: #{tpu_custom_call.1} parent=1 // loop_header
      %s14 = sphi 0, %s18
      %p15 = scmp.ge.s32.totalorder %s14, 4
      %s24 = sphi 0, %s26
      %s27 = sphi 0, %s24
      %s28 = sphi 0, %s27
      %s44 = sphi 0, %s28
      %s48 = sphi 0, %s48
      %s50 = sphi 0, %s48
      %s51 = sphi 0, %s50
      %s65 = sphi 0, %s51
      %s69 = sphi 0, %s69
      %s71 = sphi 0, %s69
      %s72 = sphi 0, %s71
      %s86 = sphi 0, %s72
      %s90 = sphi 0, %s90
      %s92 = sphi 0, %s90
      %s93 = sphi 0, %s92
      %s107 = sphi 0, %s93
      %s111 = sphi 0, %s111
      %s113 = sphi 0, %s111
      %s114 = sphi 0, %s113
      %s128 = sphi 0, %s114
      %s134 = sphi 0, %s136
      %s137 = sphi 0, %s134
      %s138 = sphi 0, %s137
      %s154 = sphi 0, %s138
    $region4: #{tpu_custom_call.1} parent=1 // loop_header_branch
      %17 = sbr.rel (%p15) target = $region8
    $region5: #{tpu_custom_call.1} parent=1 // loop_body
      %s19 = ssub.s32 %s14, 1
      %s20 = ssub.s32 %s14, 2
      %s21 = sadd.s32 %s14, 1
      %s22 = ssub.s32 %s14, %s21
      %p23 = scmp.eq.s32.totalorder %s22, 0
      %s25 = sadd.s32 %s24, 1
      %s26 = scalar_select %p23, %s24, %s25
      %p29 = pneg %p23
      %p30 = scmp.eq.s32.totalorder %s14, 1
      %p31 = por %p29, %p30
      %p32 = scmp.ne.s32.totalorder %s24, %s27
      %p33 = scmp.eq.s32.totalorder %s14, 0
      %p34 = por %p32, %p33
      %p35 = scmp.ne.s32.totalorder %s24, %s27
      %p36 = scmp.eq.s32.totalorder %s19, 1
      %p37 = por %p35, %p36
      %p38 = scmp.ne.s32.totalorder %s27, %s28
      %p39 = scmp.eq.s32.totalorder %s19, 0
      %p40 = por %p38, %p39
      %p41 = scmp.ne.s32.totalorder %s27, %s28
      %p42 = scmp.eq.s32.totalorder %s20, 1
      %p43 = por %p41, %p42
      %p45 = scmp.ne.s32.totalorder %s28, %s44
      %p46 = scmp.eq.s32.totalorder %s20, 0
      %p47 = por %p45, %p46
      %s49 = sadd.s32 %s48, 1
      %p52 = scmp.eq.s32.totalorder %s14, 1
      %p53 = scmp.ne.s32.totalorder %s48, %s50
      %p54 = scmp.eq.s32.totalorder %s14, 0
      %p55 = por %p53, %p54
      %p56 = scmp.ne.s32.totalorder %s48, %s50
      %p57 = scmp.eq.s32.totalorder %s19, 1
      %p58 = por %p56, %p57
      %p59 = scmp.ne.s32.totalorder %s50, %s51
      %p60 = scmp.eq.s32.totalorder %s19, 0
      %p61 = por %p59, %p60
      %p62 = scmp.ne.s32.totalorder %s50, %s51
      %p63 = scmp.eq.s32.totalorder %s20, 1
      %p64 = por %p62, %p63
      %p66 = scmp.ne.s32.totalorder %s51, %s65
      %p67 = scmp.eq.s32.totalorder %s20, 0
      %p68 = por %p66, %p67
      %s70 = sadd.s32 %s69, 1
      %p73 = scmp.eq.s32.totalorder %s14, 1
      %p74 = scmp.ne.s32.totalorder %s69, %s71
      %p75 = scmp.eq.s32.totalorder %s14, 0
      %p76 = por %p74, %p75
      %p77 = scmp.ne.s32.totalorder %s69, %s71
      %p78 = scmp.eq.s32.totalorder %s19, 1
      %p79 = por %p77, %p78
      %p80 = scmp.ne.s32.totalorder %s71, %s72
      %p81 = scmp.eq.s32.totalorder %s19, 0
      %p82 = por %p80, %p81
      %p83 = scmp.ne.s32.totalorder %s71, %s72
      %p84 = scmp.eq.s32.totalorder %s20, 1
      %p85 = por %p83, %p84
      %p87 = scmp.ne.s32.totalorder %s72, %s86
      %p88 = scmp.eq.s32.totalorder %s20, 0
      %p89 = por %p87, %p88
      %s91 = sadd.s32 %s90, 1
      %p94 = scmp.eq.s32.totalorder %s14, 1
      %p95 = scmp.ne.s32.totalorder %s90, %s92
      %p96 = scmp.eq.s32.totalorder %s14, 0
      %p97 = por %p95, %p96
      %p98 = scmp.ne.s32.totalorder %s90, %s92
      %p99 = scmp.eq.s32.totalorder %s19, 1
      %p100 = por %p98, %p99
      %p101 = scmp.ne.s32.totalorder %s92, %s93
      %p102 = scmp.eq.s32.totalorder %s19, 0
      %p103 = por %p101, %p102
      %p104 = scmp.ne.s32.totalorder %s92, %s93
      %p105 = scmp.eq.s32.totalorder %s20, 1
      %p106 = por %p104, %p105
      %p108 = scmp.ne.s32.totalorder %s93, %s107
      %p109 = scmp.eq.s32.totalorder %s20, 0
      %p110 = por %p108, %p109
      %s112 = sadd.s32 %s111, 1
      %p115 = scmp.eq.s32.totalorder %s14, 1
      %p116 = scmp.ne.s32.totalorder %s111, %s113
      %p117 = scmp.eq.s32.totalorder %s14, 0
      %p118 = por %p116, %p117
      %p119 = scmp.ne.s32.totalorder %s111, %s113
      %p120 = scmp.eq.s32.totalorder %s19, 1
      %p121 = por %p119, %p120
      %p122 = scmp.ne.s32.totalorder %s113, %s114
      %p123 = scmp.eq.s32.totalorder %s19, 0
      %p124 = por %p122, %p123
      %p125 = scmp.ne.s32.totalorder %s113, %s114
      %p126 = scmp.eq.s32.totalorder %s20, 1
      %p127 = por %p125, %p126
      %p129 = scmp.ne.s32.totalorder %s114, %s128
      %p130 = scmp.eq.s32.totalorder %s20, 0
      %p131 = por %p129, %p130
      %s132 = ssub.s32 %s14, %s21
      %p133 = scmp.eq.s32.totalorder %s132, 0
      %s135 = sadd.s32 %s134, 1
      %s136 = scalar_select %p133, %s134, %s135
      %p139 = pneg %p133
      %p140 = scmp.eq.s32.totalorder %s14, 1
      %p141 = por %p139, %p140
      %p142 = scmp.ne.s32.totalorder %s134, %s137
      %p143 = scmp.eq.s32.totalorder %s14, 0
      %p144 = por %p142, %p143
      %p145 = scmp.ne.s32.totalorder %s134, %s137
      %p146 = scmp.eq.s32.totalorder %s19, 1
      %p147 = por %p145, %p146
      %p148 = scmp.ne.s32.totalorder %s137, %s138
      %p149 = scmp.eq.s32.totalorder %s19, 0
      %p150 = por %p148, %p149
      %p151 = scmp.ne.s32.totalorder %s137, %s138
      %p152 = scmp.eq.s32.totalorder %s20, 1
      %p153 = por %p151, %p152
      %p155 = scmp.ne.s32.totalorder %s138, %s154
      %p156 = scmp.eq.s32.totalorder %s20, 0
      %p157 = por %p155, %p156
      %p158 = scmp.le.s32.totalorder 1, %s14
      %p159 = scmp.lt.s32.totalorder %s14, 3
      %p160 = pnand %p158, %p159
      %p161 = pneg %p160
      // Predicated region
      $region9: #{tpu_custom_call.1} parent=5 // pred_check
        _
      $region10: #{tpu_custom_call.1} parent=5 // pred_check_branch
        %163 = sbr.rel (%p160) target = $region12
      $region11: #{tpu_custom_call.1} parent=5 // pred_region
        %s164 = ssub.s32 %s14, 1
        // Predicated region
        $region13: #{tpu_custom_call.1} parent=11 // pred_check
          %p165 = pneg %p61
        $region14: #{tpu_custom_call.1} parent=11 // pred_check_branch
          %167 = sbr.rel (%p165) target = $region16
        $region15: #{tpu_custom_call.1} parent=11 // pred_region
          _
        $region16: #{tpu_custom_call.1} parent=11 // pred_fallthru
          _
        // Predicated region
        $region17: #{tpu_custom_call.1} parent=11 // pred_check
          %p168 = pneg %p82
        $region18: #{tpu_custom_call.1} parent=11 // pred_check_branch
          %170 = sbr.rel (%p168) target = $region20
        $region19: #{tpu_custom_call.1} parent=11 // pred_region
          _
        $region20: #{tpu_custom_call.1} parent=11 // pred_fallthru
          _
        // Predicated region
        $region21: #{tpu_custom_call.1} parent=11 // pred_check
          %p171 = pneg %p103
        $region22: #{tpu_custom_call.1} parent=11 // pred_check_branch
          %173 = sbr.rel (%p171) target = $region24
        $region23: #{tpu_custom_call.1} parent=11 // pred_region
          _
        $region24: #{tpu_custom_call.1} parent=11 // pred_fallthru
          _
        // Predicated region
        $region25: #{tpu_custom_call.1} parent=11 // pred_check
          %p174 = pneg %p124
        $region26: #{tpu_custom_call.1} parent=11 // pred_check_branch
          %176 = sbr.rel (%p174) target = $region28
        $region27: #{tpu_custom_call.1} parent=11 // pred_region
          _
        $region28: #{tpu_custom_call.1} parent=11 // pred_fallthru
          _
      $region12: #{tpu_custom_call.1} parent=5 // pred_fallthru
        _
      %p177 = scmp.lt.s32.totalorder %s14, 2
      // Predicated region
      $region29: #{tpu_custom_call.1} parent=5 // pred_check
        %p178 = pneg %p177
      $region30: #{tpu_custom_call.1} parent=5 // pred_check_branch
        %180 = sbr.rel (%p178) target = $region32
      $region31: #{tpu_custom_call.1} parent=5 // pred_region
        // Predicated region
        $region33: #{tpu_custom_call.1} parent=31 // pred_check
          %p181 = pneg %p34
        $region34: #{tpu_custom_call.1} parent=31 // pred_check_branch
          %183 = sbr.rel (%p181) target = $region36
        $region35: #{tpu_custom_call.1} parent=31 // pred_region
          %s184 = smul.u32 16, %s14
          %p185 = scmp.lt.s32.totalorder %s184, 31
          %s186 = scalar_select %p185, %s184, 31
          %s187 = smul.addr %s186, 8
          %s188 = scalar_lea.vmem %s0, %s187
          %s189 = smul.u32 16, %s14
        $region36: #{tpu_custom_call.1} parent=31 // pred_fallthru
          _
      $region32: #{tpu_custom_call.1} parent=5 // pred_fallthru
        _
      %p190 = scmp.le.s32.totalorder 1, %s14
      %p191 = scmp.lt.s32.totalorder %s14, 3
      %p192 = pnand %p190, %p191
      %p193 = pneg %p192
      // Predicated region
      $region37: #{tpu_custom_call.1} parent=5 // pred_check
        _
      $region38: #{tpu_custom_call.1} parent=5 // pred_check_branch
        %195 = sbr.rel (%p192) target = $region40
      $region39: #{tpu_custom_call.1} parent=5 // pred_region
        %s196 = ssub.s32 %s14, 1
        %s197 = smul.u32 16, %s19
        %p198 = scmp.lt.s32.totalorder %s197, 31
        %s199 = scalar_select %p198, %s197, 31
        %s200 = smul.addr %s199, 8
        %s201 = scalar_lea.vmem %s0, %s200
        %p202 = pneg %p40
        %p203 = pneg %p37
        %p204 = pneg %p61
        %p205 = pneg %p58
        %p206 = pneg %p82
        %p207 = pneg %p79
        %p208 = pneg %p103
        %p209 = pneg %p100
        %p210 = pneg %p124
        %p211 = pneg %p121
        %p212 = pneg %p150
        %p213 = pneg %p147
        %s214 = sand.u32 %s137, 1
        %s215 = scalar_lea.sflag [#allocation3], %s214
        %s216 = sand.u32 %s137, 1
        %s217 = smul.addr %s216, 128
        %s218 = scalar_lea.vmem [#allocation2], %s217
        %s219 = smul.u32 16, %s19
        %p220 = scmp.lt.s32.totalorder %s219, 31
        %s221 = scalar_select %p220, %s219, 31
        %s222 = smul.addr %s221, 8
        %s223 = scalar_lea.vmem %s0, %s222
        %s224 = smul.u32 16, %s19
        %s225 = smul.u32 16, %s19
        %v226 = vld [vmem:[%s223] sm:$0xff]
        %v227 = vld [vmem:[%s223 + $0x8] sm:$0xff]
        %v228 = vld [vmem:[%s223 + $0x10] sm:$0xff]
        %v229 = vld [vmem:[%s223 + $0x18] sm:$0xff]
        %v230 = vld [vmem:[%s223 + $0x20] sm:$0xff]
        %v231 = vld [vmem:[%s223 + $0x28] sm:$0xff]
        %v232 = vld [vmem:[%s223 + $0x30] sm:$0xff]
        %v233 = vld [vmem:[%s223 + $0x38] sm:$0xff]
        %v234 = vld [vmem:[%s223 + $0x40] sm:$0xff]
        %v235 = vld [vmem:[%s223 + $0x48] sm:$0xff]
        %v236 = vld [vmem:[%s223 + $0x50] sm:$0xff]
        %v237 = vld [vmem:[%s223 + $0x58] sm:$0xff]
        %v238 = vld [vmem:[%s223 + $0x60] sm:$0xff]
        %v239 = vld [vmem:[%s223 + $0x68] sm:$0xff]
        %v240 = vld [vmem:[%s223 + $0x70] sm:$0xff]
        %v241 = vld [vmem:[%s223 + $0x78] sm:$0xff]
        %v242 = vld [vmem:[%s1] sm:$0xff]
        %v243 = vld [vmem:[%s1 + $0x8] sm:$0xff]
        %v244 = vld [vmem:[%s2] sm:$0x1]
        %v246 = vlaneseq
        %v247 = vshrl.u32 %v246, 7
        %v248 = vsub.s32 0, %v247
        %v249 = vrot.slane %v244, %v248
        %vm251 = vcmask 130048
        %v253 = vsel %vm251, %v226, 0
        %v256 = vsel %vm251, %v227, 0
        %v259 = vsel %vm251, %v228, 0
        %v262 = vsel %vm251, %v229, 0
        %v265 = vsel %vm251, %v230, 0
        %v268 = vsel %vm251, %v231, 0
        %v271 = vsel %vm251, %v232, 0
        %v274 = vsel %vm251, %v233, 0
        %v277 = vsel %vm251, %v234, 0
        %v280 = vsel %vm251, %v235, 0
        %v283 = vsel %vm251, %v236, 0
        %v286 = vsel %vm251, %v237, 0
        %v289 = vsel %vm251, %v238, 0
        %v292 = vsel %vm251, %v239, 0
        %v295 = vsel %vm251, %v240, 0
        %v298 = vsel %vm251, %v241, 0
        %300 = vmatprep.subr.mxu0 0.0
        %301 = vmatpush1.msra.mxu0 %v242
        %302 = vmatprep.subr.mxu0 0.0
        %303 = vmatpush1.msra.mxu0 %v243
        %304 = vmatprep.subr.mxu0 0.0
        %305 = vmatpush1.msra.mxu0 0.0
        %306 = vmatprep.subr.mxu0 0.0
        %307 = vmatpush1.msra.mxu0 0.0
        %308 = vmatprep.subr.mxu0 0.0
        %309 = vmatpush1.msra.mxu0 0.0
        %310 = vmatprep.subr.mxu0 0.0
        %311 = vmatpush1.msra.mxu0 0.0
        %312 = vmatprep.subr.mxu0 0.0
        %313 = vmatpush1.msra.mxu0 0.0
        %314 = vmatprep.subr.mxu0 0.0
        %315 = vmatpush1.msra.mxu0 0.0
        %316 = vmatprep.subr.mxu0 0.0
        %317 = vmatpush1.msra.mxu0 0.0
        %318 = vmatprep.subr.mxu0 0.0
        %319 = vmatpush1.msra.mxu0 0.0
        %320 = vmatprep.subr.mxu0 0.0
        %321 = vmatpush1.msra.mxu0 0.0
        %322 = vmatprep.subr.mxu0 0.0
        %323 = vmatpush1.msra.mxu0 0.0
        %324 = vmatprep.subr.mxu0 0.0
        %325 = vmatpush1.msra.mxu0 0.0
        %326 = vmatprep.subr.mxu0 0.0
        %327 = vmatpush1.msra.mxu0 0.0
        %328 = vmatprep.subr.mxu0 0.0
        %329 = vmatpush1.msra.mxu0 0.0
        %330 = vmatprep.subr.mxu0 0.0
        %331 = vmatpush1.msra.mxu0 0.0
        %332 = vmatprep.subr.mxu0 0.0
        %333 = vmatpush1.msra.mxu0 0.0
        %334 = vmatprep.subr.mxu0 0.0
        %335 = vmatpush1.msra.mxu0 0.0
        %336 = vmatprep.subr.mxu0 0.0
        %337 = vmatpush1.msra.mxu0 0.0
        %338 = vmatprep.subr.mxu0 0.0
        %339 = vmatpush1.msra.mxu0 0.0
        %340 = vmatprep.subr.mxu0 0.0
        %341 = vmatpush1.msra.mxu0 0.0
        %342 = vmatprep.subr.mxu0 0.0
        %343 = vmatpush1.msra.mxu0 0.0
        %344 = vmatprep.subr.mxu0 0.0
        %345 = vmatpush1.msra.mxu0 0.0
        %346 = vmatprep.subr.mxu0 0.0
        %347 = vmatpush1.msra.mxu0 0.0
        %348 = vmatprep.subr.mxu0 0.0
        %349 = vmatpush1.msra.mxu0 0.0
        %350 = vmatprep.subr.mxu0 0.0
        %351 = vmatpush1.msra.mxu0 0.0
        %352 = vmatprep.subr.mxu0 0.0
        %353 = vmatpush1.msra.mxu0 0.0
        %354 = vmatprep.subr.mxu0 0.0
        %355 = vmatpush1.msra.mxu0 0.0
        %356 = vmatprep.subr.mxu0 0.0
        %357 = vmatpush1.msra.mxu0 0.0
        %358 = vmatprep.subr.mxu0 0.0
        %359 = vmatpush1.msra.mxu0 0.0
        %360 = vmatprep.subr.mxu0 0.0
        %361 = vmatpush1.msra.mxu0 0.0
        %362 = vmatprep.subr.mxu0 0.0
        %363 = vmatpush1.msra.mxu0 0.0
        %364 = vmatprep.mubr.f32.mxu0 0.0
        %365 = vmatmul.mubr.f32.gmra.mrb[0].mxu0 %v253
        %v366 = vpop.f32.mrb[0].mxu0
        %v367 = vadd.f32 %v249, %v366
        %v368 = vpop.f32.mrb[0].mxu0
        %369 = vmatprep.mubr.f32.mxu0 0.0
        %370 = vmatmul.mubr.f32.gmra.mrb[0].mxu0 %v256
        %v371 = vpop.f32.mrb[0].mxu0
        %v372 = vadd.f32 %v249, %v371
        %v373 = vpop.f32.mrb[0].mxu0
        %374 = vmatprep.mubr.f32.mxu0 0.0
        %375 = vmatmul.mubr.f32.gmra.mrb[0].mxu0 %v259
        %v376 = vpop.f32.mrb[0].mxu0
        %v377 = vadd.f32 %v249, %v376
        %v378 = vpop.f32.mrb[0].mxu0
        %379 = vmatprep.mubr.f32.mxu0 0.0
        %380 = vmatmul.mubr.f32.gmra.mrb[0].mxu0 %v262
        %v381 = vpop.f32.mrb[0].mxu0
        %v382 = vadd.f32 %v249, %v381
        %v383 = vpop.f32.mrb[0].mxu0
        %384 = vmatprep.mubr.f32.mxu0 0.0
        %385 = vmatmul.mubr.f32.gmra.mrb[0].mxu0 %v265
        %v386 = vpop.f32.mrb[0].mxu0
        %v387 = vadd.f32 %v249, %v386
        %v388 = vpop.f32.mrb[0].mxu0
        %389 = vmatprep.mubr.f32.mxu0 0.0
        %390 = vmatmul.mubr.f32.gmra.mrb[0].mxu0 %v268
        %v391 = vpop.f32.mrb[0].mxu0
        %v392 = vadd.f32 %v249, %v391
        %v393 = vpop.f32.mrb[0].mxu0
        %394 = vmatprep.mubr.f32.mxu0 0.0
        %395 = vmatmul.mubr.f32.gmra.mrb[0].mxu0 %v271
        %v396 = vpop.f32.mrb[0].mxu0
        %v397 = vadd.f32 %v249, %v396
        %v398 = vpop.f32.mrb[0].mxu0
        %399 = vmatprep.mubr.f32.mxu0 0.0
        %400 = vmatmul.mubr.f32.gmra.mrb[0].mxu0 %v274
        %v401 = vpop.f32.mrb[0].mxu0
        %v402 = vadd.f32 %v249, %v401
        %v403 = vpop.f32.mrb[0].mxu0
        %404 = vmatprep.mubr.f32.mxu0 0.0
        %405 = vmatmul.mubr.f32.gmra.mrb[0].mxu0 %v277
        %v406 = vpop.f32.mrb[0].mxu0
        %v407 = vadd.f32 %v249, %v406
        %v408 = vpop.f32.mrb[0].mxu0
        %409 = vmatprep.mubr.f32.mxu0 0.0
        %410 = vmatmul.mubr.f32.gmra.mrb[0].mxu0 %v280
        %v411 = vpop.f32.mrb[0].mxu0
        %v412 = vadd.f32 %v249, %v411
        %v413 = vpop.f32.mrb[0].mxu0
        %414 = vmatprep.mubr.f32.mxu0 0.0
        %415 = vmatmul.mubr.f32.gmra.mrb[0].mxu0 %v283
        %v416 = vpop.f32.mrb[0].mxu0
        %v417 = vadd.f32 %v249, %v416
        %v418 = vpop.f32.mrb[0].mxu0
        %419 = vmatprep.mubr.f32.mxu0 0.0
        %420 = vmatmul.mubr.f32.gmra.mrb[0].mxu0 %v286
        %v421 = vpop.f32.mrb[0].mxu0
        %v422 = vadd.f32 %v249, %v421
        %v423 = vpop.f32.mrb[0].mxu0
        %424 = vmatprep.mubr.f32.mxu0 0.0
        %425 = vmatmul.mubr.f32.gmra.mrb[0].mxu0 %v289
        %v426 = vpop.f32.mrb[0].mxu0
        %v427 = vadd.f32 %v249, %v426
        %v428 = vpop.f32.mrb[0].mxu0
        %429 = vmatprep.mubr.f32.mxu0 0.0
        %430 = vmatmul.mubr.f32.gmra.mrb[0].mxu0 %v292
        %v431 = vpop.f32.mrb[0].mxu0
        %v432 = vadd.f32 %v249, %v431
        %v433 = vpop.f32.mrb[0].mxu0
        %434 = vmatprep.mubr.f32.mxu0 0.0
        %435 = vmatmul.mubr.f32.gmra.mrb[0].mxu0 %v295
        %v436 = vpop.f32.mrb[0].mxu0
        %v437 = vadd.f32 %v249, %v436
        %v438 = vpop.f32.mrb[0].mxu0
        %439 = vmatprep.mubr.f32.mxu0 0.0
        %440 = vmatmul.mubr.f32.gmra.mrb[0].mxu0 %v298
        %v441 = vpop.f32.mrb[0].mxu0
        %v442 = vadd.f32 %v249, %v441
        %v443 = vpop.f32.mrb[0].mxu0
        %444 = vdwg.mxu0
        %v445 = vmax.f32 %v367, 0.0
        %v446 = vmax.f32 %v372, 0.0
        %v447 = vmax.f32 %v377, 0.0
        %v448 = vmax.f32 %v382, 0.0
        %v449 = vmax.f32 %v387, 0.0
        %v450 = vmax.f32 %v392, 0.0
        %v451 = vmax.f32 %v397, 0.0
        %v452 = vmax.f32 %v402, 0.0
        %v453 = vmax.f32 %v407, 0.0
        %v454 = vmax.f32 %v412, 0.0
        %v455 = vmax.f32 %v417, 0.0
        %v456 = vmax.f32 %v422, 0.0
        %v457 = vmax.f32 %v427, 0.0
        %v458 = vmax.f32 %v432, 0.0
        %v459 = vmax.f32 %v437, 0.0
        %v460 = vmax.f32 %v442, 0.0
        %v461 = vld [vmem:[%s3] sm:$0xff]
        %v462 = vld [vmem:[%s3 + $0x8] sm:$0xff]
        %v463 = vld [vmem:[%s3 + $0x10] sm:$0xff]
        %v464 = vld [vmem:[%s3 + $0x18] sm:$0xff]
        %v465 = vld [vmem:[%s3 + $0x20] sm:$0xff]
        %v466 = vld [vmem:[%s3 + $0x28] sm:$0xff]
        %v467 = vld [vmem:[%s3 + $0x30] sm:$0xff]
        %v468 = vld [vmem:[%s3 + $0x38] sm:$0xff]
        %v469 = vld [vmem:[%s3 + $0x40] sm:$0xff]
        %v470 = vld [vmem:[%s3 + $0x48] sm:$0xff]
        %v471 = vld [vmem:[%s3 + $0x50] sm:$0xff]
        %v472 = vld [vmem:[%s3 + $0x58] sm:$0xff]
        %v473 = vld [vmem:[%s3 + $0x60] sm:$0xff]
        %v474 = vld [vmem:[%s3 + $0x68] sm:$0xff]
        %v475 = vld [vmem:[%s3 + $0x70] sm:$0xff]
        %v476 = vld [vmem:[%s3 + $0x78] sm:$0xff]
        %v477 = vld [vmem:[%s4] sm:$0x1]
        %v479 = vlaneseq
        %v480 = vshrl.u32 %v479, 7
        %v481 = vsub.s32 0, %v480
        %v482 = vrot.slane %v477, %v481
        %484 = vmatprep.subr.mxu0 0.0
        %485 = vmatpush1.msra.mxu0 %v461
        %486 = vmatprep.subr.mxu0 0.0
        %487 = vmatpush1.msra.mxu0 %v462
        %488 = vmatprep.subr.mxu0 0.0
        %489 = vmatpush1.msra.mxu0 %v463
        %490 = vmatprep.subr.mxu0 0.0
        %491 = vmatpush1.msra.mxu0 %v464
        %492 = vmatprep.subr.mxu0 0.0
        %493 = vmatpush1.msra.mxu0 %v465
        %494 = vmatprep.subr.mxu0 0.0
        %495 = vmatpush1.msra.mxu0 %v466
        %496 = vmatprep.subr.mxu0 0.0
        %497 = vmatpush1.msra.mxu0 %v467
        %498 = vmatprep.subr.mxu0 0.0
        %499 = vmatpush1.msra.mxu0 %v468
        %500 = vmatprep.subr.mxu0 0.0
        %501 = vmatpush1.msra.mxu0 %v469
        %502 = vmatprep.subr.mxu0 0.0
        %503 = vmatpush1.msra.mxu0 %v470
        %504 = vmatprep.subr.mxu0 0.0
        %505 = vmatpush1.msra.mxu0 %v471
        %506 = vmatprep.subr.mxu0 0.0
        %507 = vmatpush1.msra.mxu0 %v472
        %508 = vmatprep.subr.mxu0 0.0
        %509 = vmatpush1.msra.mxu0 %v473
        %510 = vmatprep.subr.mxu0 0.0
        %511 = vmatpush1.msra.mxu0 %v474
        %512 = vmatprep.subr.mxu0 0.0
        %513 = vmatpush1.msra.mxu0 %v475
        %514 = vmatprep.subr.mxu0 0.0
        %515 = vmatpush1.msra.mxu0 %v476
        %516 = vmatprep.subr.mxu0 0.0
        %517 = vmatpush1.msra.mxu0 0.0
        %518 = vmatprep.subr.mxu0 0.0
        %519 = vmatpush1.msra.mxu0 0.0
        %520 = vmatprep.subr.mxu0 0.0
        %521 = vmatpush1.msra.mxu0 0.0
        %522 = vmatprep.subr.mxu0 0.0
        %523 = vmatpush1.msra.mxu0 0.0
        %524 = vmatprep.subr.mxu0 0.0
        %525 = vmatpush1.msra.mxu0 0.0
        %526 = vmatprep.subr.mxu0 0.0
        %527 = vmatpush1.msra.mxu0 0.0
        %528 = vmatprep.subr.mxu0 0.0
        %529 = vmatpush1.msra.mxu0 0.0
        %530 = vmatprep.subr.mxu0 0.0
        %531 = vmatpush1.msra.mxu0 0.0
        %532 = vmatprep.subr.mxu0 0.0
        %533 = vmatpush1.msra.mxu0 0.0
        %534 = vmatprep.subr.mxu0 0.0
        %535 = vmatpush1.msra.mxu0 0.0
        %536 = vmatprep.subr.mxu0 0.0
        %537 = vmatpush1.msra.mxu0 0.0
        %538 = vmatprep.subr.mxu0 0.0
        %539 = vmatpush1.msra.mxu0 0.0
        %540 = vmatprep.subr.mxu0 0.0
        %541 = vmatpush1.msra.mxu0 0.0
        %542 = vmatprep.subr.mxu0 0.0
        %543 = vmatpush1.msra.mxu0 0.0
        %544 = vmatprep.subr.mxu0 0.0
        %545 = vmatpush1.msra.mxu0 0.0
        %546 = vmatprep.subr.mxu0 0.0
        %547 = vmatpush1.msra.mxu0 0.0
        %548 = vmatprep.mubr.f32.mxu0 0.0
        %549 = vmatmul.mubr.f32.gmra.mrb[0].mxu0 %v445
        %v550 = vpop.f32.mrb[0].mxu0
        %v551 = vadd.f32 %v482, %v550
        %v552 = vpop.f32.mrb[0].mxu0
        %553 = vmatprep.mubr.f32.mxu0 0.0
        %554 = vmatmul.mubr.f32.gmra.mrb[0].mxu0 %v446
        %v555 = vpop.f32.mrb[0].mxu0
        %v556 = vadd.f32 %v482, %v555
        %v557 = vpop.f32.mrb[0].mxu0
        %558 = vmatprep.mubr.f32.mxu0 0.0
        %559 = vmatmul.mubr.f32.gmra.mrb[0].mxu0 %v447
        %v560 = vpop.f32.mrb[0].mxu0
        %v561 = vadd.f32 %v482, %v560
        %v562 = vpop.f32.mrb[0].mxu0
        %563 = vmatprep.mubr.f32.mxu0 0.0
        %564 = vmatmul.mubr.f32.gmra.mrb[0].mxu0 %v448
        %v565 = vpop.f32.mrb[0].mxu0
        %v566 = vadd.f32 %v482, %v565
        %v567 = vpop.f32.mrb[0].mxu0
        %568 = vmatprep.mubr.f32.mxu0 0.0
        %569 = vmatmul.mubr.f32.gmra.mrb[0].mxu0 %v449
        %v570 = vpop.f32.mrb[0].mxu0
        %v571 = vadd.f32 %v482, %v570
        %v572 = vpop.f32.mrb[0].mxu0
        %573 = vmatprep.mubr.f32.mxu0 0.0
        %574 = vmatmul.mubr.f32.gmra.mrb[0].mxu0 %v450
        %v575 = vpop.f32.mrb[0].mxu0
        %v576 = vadd.f32 %v482, %v575
        %v577 = vpop.f32.mrb[0].mxu0
        %578 = vmatprep.mubr.f32.mxu0 0.0
        %579 = vmatmul.mubr.f32.gmra.mrb[0].mxu0 %v451
        %v580 = vpop.f32.mrb[0].mxu0
        %v581 = vadd.f32 %v482, %v580
        %v582 = vpop.f32.mrb[0].mxu0
        %583 = vmatprep.mubr.f32.mxu0 0.0
        %584 = vmatmul.mubr.f32.gmra.mrb[0].mxu0 %v452
        %v585 = vpop.f32.mrb[0].mxu0
        %v586 = vadd.f32 %v482, %v585
        %v587 = vpop.f32.mrb[0].mxu0
        %588 = vmatprep.mubr.f32.mxu0 0.0
        %589 = vmatmul.mubr.f32.gmra.mrb[0].mxu0 %v453
        %v590 = vpop.f32.mrb[0].mxu0
        %v591 = vadd.f32 %v482, %v590
        %v592 = vpop.f32.mrb[0].mxu0
        %593 = vmatprep.mubr.f32.mxu0 0.0
        %594 = vmatmul.mubr.f32.gmra.mrb[0].mxu0 %v454
        %v595 = vpop.f32.mrb[0].mxu0
        %v596 = vadd.f32 %v482, %v595
        %v597 = vpop.f32.mrb[0].mxu0
        %598 = vmatprep.mubr.f32.mxu0 0.0
        %599 = vmatmul.mubr.f32.gmra.mrb[0].mxu0 %v455
        %v600 = vpop.f32.mrb[0].mxu0
        %v601 = vadd.f32 %v482, %v600
        %v602 = vpop.f32.mrb[0].mxu0
        %603 = vmatprep.mubr.f32.mxu0 0.0
        %604 = vmatmul.mubr.f32.gmra.mrb[0].mxu0 %v456
        %v605 = vpop.f32.mrb[0].mxu0
        %v606 = vadd.f32 %v482, %v605
        %v607 = vpop.f32.mrb[0].mxu0
        %608 = vmatprep.mubr.f32.mxu0 0.0
        %609 = vmatmul.mubr.f32.gmra.mrb[0].mxu0 %v457
        %v610 = vpop.f32.mrb[0].mxu0
        %v611 = vadd.f32 %v482, %v610
        %v612 = vpop.f32.mrb[0].mxu0
        %613 = vmatprep.mubr.f32.mxu0 0.0
        %614 = vmatmul.mubr.f32.gmra.mrb[0].mxu0 %v458
        %v615 = vpop.f32.mrb[0].mxu0
        %v616 = vadd.f32 %v482, %v615
        %v617 = vpop.f32.mrb[0].mxu0
        %618 = vmatprep.mubr.f32.mxu0 0.0
        %619 = vmatmul.mubr.f32.gmra.mrb[0].mxu0 %v459
        %v620 = vpop.f32.mrb[0].mxu0
        %v621 = vadd.f32 %v482, %v620
        %v622 = vpop.f32.mrb[0].mxu0
        %623 = vmatprep.mubr.f32.mxu0 0.0
        %624 = vmatmul.mubr.f32.gmra.mrb[0].mxu0 %v460
        %v625 = vpop.f32.mrb[0].mxu0
        %v626 = vadd.f32 %v482, %v625
        %v627 = vpop.f32.mrb[0].mxu0
        %628 = vdwg.mxu0
        %v629 = vmax.f32 %v551, 0.0
        %v630 = vmax.f32 %v556, 0.0
        %v631 = vmax.f32 %v561, 0.0
        %v632 = vmax.f32 %v566, 0.0
        %v633 = vmax.f32 %v571, 0.0
        %v634 = vmax.f32 %v576, 0.0
        %v635 = vmax.f32 %v581, 0.0
        %v636 = vmax.f32 %v586, 0.0
        %v637 = vmax.f32 %v591, 0.0
        %v638 = vmax.f32 %v596, 0.0
        %v639 = vmax.f32 %v601, 0.0
        %v640 = vmax.f32 %v606, 0.0
        %v641 = vmax.f32 %v611, 0.0
        %v642 = vmax.f32 %v616, 0.0
        %v643 = vmax.f32 %v621, 0.0
        %v644 = vmax.f32 %v626, 0.0
        %645 = vst [vmem:[%s218] sm:$0xff] %v629
        %646 = vst [vmem:[%s218 + $0x8] sm:$0xff] %v630
        %647 = vst [vmem:[%s218 + $0x10] sm:$0xff] %v631
        %648 = vst [vmem:[%s218 + $0x18] sm:$0xff] %v632
        %649 = vst [vmem:[%s218 + $0x20] sm:$0xff] %v633
        %650 = vst [vmem:[%s218 + $0x28] sm:$0xff] %v634
        %651 = vst [vmem:[%s218 + $0x30] sm:$0xff] %v635
        %652 = vst [vmem:[%s218 + $0x38] sm:$0xff] %v636
        %653 = vst [vmem:[%s218 + $0x40] sm:$0xff] %v637
        %654 = vst [vmem:[%s218 + $0x48] sm:$0xff] %v638
        %655 = vst [vmem:[%s218 + $0x50] sm:$0xff] %v639
        %656 = vst [vmem:[%s218 + $0x58] sm:$0xff] %v640
        %657 = vst [vmem:[%s218 + $0x60] sm:$0xff] %v641
        %658 = vst [vmem:[%s218 + $0x68] sm:$0xff] %v642
        %659 = vst [vmem:[%s218 + $0x70] sm:$0xff] %v643
        %660 = vst [vmem:[%s218 + $0x78] sm:$0xff] %v644
        %s661 = sand.u32 %s137, 1
        %s662 = scalar_lea.sflag [#allocation3], %s661
        %s663 = sand.u32 %s137, 1
        %s664 = smul.addr %s663, 128
        %s665 = scalar_lea.vmem [#allocation2], %s664
        // Predicated region
        $region41: #{tpu_custom_call.1} parent=39 // pred_check
          %p666 = pneg %p147
        $region42: #{tpu_custom_call.1} parent=39 // pred_check_branch
          %668 = sbr.rel (%p666) target = $region44
        $region43: #{tpu_custom_call.1} parent=39 // pred_region
          %s669 = smul.u32 16, %s19
          %s671 = ssub.s32 2048, 2048
          %672 = vsyncadd %s662, %s671
          %s673 = smul.addr %s669, 128
          %s674 = scalar_lea.hbm %s5, %s673
          %s675 = sshll.u32 %s665, 4
          %s676 = int_to_ptr.vmem [resolvable:$true] %s675
          %681 = dma.vmem_to_hbm [thread:$0]  %s676, 2048, %s674, %s662, 128, 128, 8
        $region44: #{tpu_custom_call.1} parent=39 // pred_fallthru
          _
      $region40: #{tpu_custom_call.1} parent=5 // pred_fallthru
        _
      %p682 = scmp.le.s32.totalorder 2, %s14
      // Predicated region
      $region45: #{tpu_custom_call.1} parent=5 // pred_check
        %p683 = pneg %p682
      $region46: #{tpu_custom_call.1} parent=5 // pred_check_branch
        %685 = sbr.rel (%p683) target = $region48
      $region47: #{tpu_custom_call.1} parent=5 // pred_region
        %s686 = ssub.s32 %s14, 2
        // Predicated region
        $region49: #{tpu_custom_call.1} parent=47 // pred_check
          %p687 = pneg %p153
        $region50: #{tpu_custom_call.1} parent=47 // pred_check_branch
          %689 = sbr.rel (%p687) target = $region52
        $region51: #{tpu_custom_call.1} parent=47 // pred_region
          %s690 = sand.u32 %s138, 1
          %s691 = scalar_lea.sflag [#allocation3], %s690
          %s692 = sand.u32 %s138, 1
          %s693 = smul.addr %s692, 128
          %s694 = scalar_lea.vmem [#allocation2], %s693
          %695 = dma.done %s691, 2048
        $region52: #{tpu_custom_call.1} parent=47 // pred_fallthru
          _
      $region48: #{tpu_custom_call.1} parent=5 // pred_fallthru
        _
    $region6: #{tpu_custom_call.1} parent=1 // loop_footer
      %s18 = sadd.s32 1, %s14
    $region7: #{tpu_custom_call.1} parent=1 // loop_footer_branch
      %13 = sbr.rel target = $region3
    $region8: #{tpu_custom_call.1} parent=1 // loop_exit
      _
    %696 = vsyncpa [#allocation3], 1
    %s697 = scalar_lea.sflag [#allocation3], 1
    %698 = vsyncpa %s697, 1

</llo_original>
